<compile_context>
chip_gen: v5e
topology: v5e:2x2
jax: 0.10.0
libtpu: 0.0.40
codegen_flags: <defaults>
</compile_context>

<pallas_src>
from typing import NamedTuple

import jax
import jax.numpy as jnp
from jax import lax
from jax.experimental import pallas as pl
from jax.experimental.pallas import tpu as pltpu

_LANE = 128
_SMALL_D_MAX = 4096        # transposed small-output path is used up to this D
_MAX_BLOCK_K = 2048        # K-tile size (multiple of 128) for very large D
_TILE_BUDGET = 24 << 20    # VMEM budget for kernel buffers (< 32 MiB default)
_MAX_ROWS = 8192


def _round_up(n, m):
    return ((n + m - 1) // m) * m


def _sublane(dtype):
    # sub-32-bit dtypes pack 2 rows per sublane -> keep tiles a multiple of 16
    return 16 if jnp.dtype(dtype).itemsize < 4 else 8


# ----------------------------------------------------------------------------
# Kernels
# ----------------------------------------------------------------------------
def _small_kernel(x_ref, w_ref, b_ref, o_ref):
    # x_ref: (TB, D)  row tile of the input
    # w_ref: (L, D)   full weight, VMEM resident (single-buffered)
    # b_ref: (L, 1)   bias (f32), VMEM resident
    # o_ref: (L, TB)  transposed output tile (batch on lanes -> dense stores)
    y = lax.dot_general(
        w_ref[...], x_ref[...],
        dimension_numbers=(((1,), (1,)), ((), ())),
        preferred_element_type=jnp.float32)
    o_ref[...] = (y + b_ref[...]).astype(o_ref.dtype)


def _make_general_kernel(d, tk):
    ragged_k = (d % tk) != 0

    def kernel(x_ref, wt_ref, b_ref, o_ref, acc_ref):
        # x_ref: (TB, tk); wt_ref: (tk, L_pad); b_ref: (1, L_pad)
        # o_ref: (TB, L_pad); acc_ref: (TB, L_pad) f32 scratch
        k = pl.program_id(1)

        @pl.when(k == 0)
        def _():
            acc_ref[...] = jnp.zeros_like(acc_ref)

        xb = x_ref[...]
        if ragged_k:
            # Zero the out-of-range columns of the ragged last K block (the
            # padded weight rows are already zero, so the dot stays exact).
            col = k * tk + lax.broadcasted_iota(jnp.int32, xb.shape, 1)
            xb = jnp.where(col < d, xb, jnp.zeros_like(xb))

        acc_ref[...] += jnp.dot(xb, wt_ref[...],
                                preferred_element_type=jnp.float32)

        @pl.when(k == pl.num_programs(1) - 1)
        def _():
            o_ref[...] = (acc_ref[...] + b_ref[...]).astype(o_ref.dtype)

    return kernel


# ----------------------------------------------------------------------------
# Parameter prep (one-time: hoist out of the per-call path)
# ----------------------------------------------------------------------------
class ClassifierParams(NamedTuple):
    small: bool
    weight: jax.Array      # small: (L, D); general: (D_pad, L_pad) transposed
    bias: jax.Array        # small: (L, 1) f32; general: (1, L_pad) f32
    d: int
    l: int
    block_k: int
    compute_dtype: jnp.dtype


def prepare_classifier_params(weight, bias, *, compute_dtype=None,
                              max_block_k=_MAX_BLOCK_K):
    """One-time layout prep (transpose / pad / cast) for the classifier."""
    L, D = weight.shape
    cdt = jnp.dtype(compute_dtype if compute_dtype is not None else weight.dtype)
    small = (L < _LANE) and (D <= _SMALL_D_MAX)
    if small:
        w = weight.astype(cdt)                                      # (L, D)
        b = bias.astype(jnp.float32).reshape(L, 1)                  # (L, 1)
        tk = D
    else:
        l_pad = _round_up(L, _LANE)
        tk = D if D <= max_block_k else max_block_k
        d_pad = _round_up(D, tk)
        w = jnp.zeros((d_pad, l_pad), cdt).at[:D, :L].set(weight.T.astype(cdt))
        b = jnp.zeros((1, l_pad), jnp.float32).at[0, :L].set(
            bias.astype(jnp.float32))
    return ClassifierParams(small=small, weight=w, bias=b, d=D, l=L,
                            block_k=tk, compute_dtype=cdt)


# ----------------------------------------------------------------------------
# Tile selection / VMEM budgeting
# ----------------------------------------------------------------------------
def _pick_block_rows(batch, per_row_bytes, resident_bytes, align, *,
                     block_rows=None):
    if block_rows is not None:
        tb = max(align, (int(block_rows) // align) * align)
        return batch if tb >= batch else tb
    avail = max(_TILE_BUDGET - resident_bytes, per_row_bytes * align)
    tb = min(_MAX_ROWS, max(align, avail // per_row_bytes))
    tb = max(align, (tb // align) * align)
    if tb >= batch and batch >= 256:
        # v7x megacore: keep >= 2 grid steps so both TensorCores get work.
        tb = min(tb, _round_up(pl.cdiv(batch, 2), align))
    return batch if tb >= batch else tb


def _vmem_limit_bytes(footprint):
    # Leave the 32 MiB scoped-VMEM default alone when the footprint fits;
    # otherwise raise just enough (never the full 64 MiB of a v7x core).
    if footprint <= (28 << 20):
        return None
    return min(int(footprint * 1.25) + (4 << 20), 48 << 20)


def _run_pallas(kernel, *, grid, make_in_specs, out_specs, out_shape,
                scratch_shapes, dimension_semantics, vmem_limit, cost, args):
    """pallas_call wrapper; retries without pl.Buffered(1) if unsupported."""
    last_err = None
    for buffered in (True, False):
        cp_kwargs = dict(dimension_semantics=dimension_semantics)
        if vmem_limit is not None:
            cp_kwargs["vmem_limit_bytes"] = vmem_limit
        try:
            return pl.pallas_call(
                kernel,
                out_shape=out_shape,
                grid_spec=pltpu.PrefetchScalarGridSpec(
                    num_scalar_prefetch=0,
                    grid=grid,
                    in_specs=make_in_specs(buffered),
                    out_specs=out_specs,
                    scratch_shapes=scratch_shapes),
                compiler_params=pltpu.CompilerParams(**cp_kwargs),
                cost_estimate=cost,
            )(*args)
        except Exception as err:  # noqa: BLE001  (fallback: no Buffered(1))
            last_err = err
    raise last_err


# ----------------------------------------------------------------------------
# Forward
# ----------------------------------------------------------------------------
def classifier_apply(x, params: ClassifierParams, *, block_rows=None,
                     dropout_rate=0.0, training=False):
    """Pallas forward for Classifier: Linear(Dropout(x)), eval-mode dropout."""
    if training and dropout_rate > 0.0:
        # TODO(synk): training-mode dropout (pltpu.prng_seed/prng_random_bits +
        # 1/(1-p) scaling) is not implemented; inference dropout is identity.
        raise NotImplementedError("training-mode dropout not implemented")

    B, D = x.shape
    assert D == params.d, (D, params.d)
    cdt = params.compute_dtype
    xk = x if x.dtype == cdt else x.astype(cdt)
    out_dtype = x.dtype
    x_item = jnp.dtype(cdt).itemsize
    w_item = jnp.dtype(cdt).itemsize
    out_item = jnp.dtype(out_dtype).itemsize
    L = params.l

    if params.small:
        # ---- transposed small-output path (the module's regime) ----
        w_bytes = params.weight.size * w_item
        b_bytes = params.bias.size * 4
        resident = w_bytes + b_bytes
        per_row = 2 * (D * x_item + L * out_item)     # dbl-buffered x & out
        tb = _pick_block_rows(B, per_row, resident, _LANE,
                              block_rows=block_rows)
        grid = (pl.cdiv(B, tb),)
        footprint = per_row * tb + 2 * resident
        cost = pl.CostEstimate(
            flops=2 * B * D * L, transcendentals=0,
            bytes_accessed=B * D * x_item + w_bytes + b_bytes
                           + B * L * out_item)

        def make_in_specs(buffered):
            mode = dict(pipeline_mode=pl.Buffered(1)) if buffered else {}
            return [
                pl.BlockSpec((tb, D), lambda i: (i, 0)),          # x row tile
                pl.BlockSpec((L, D), lambda i: (0, 0), **mode),   # weight
                pl.BlockSpec((L, 1), lambda i: (0, 0), **mode),   # bias
            ]

        out = _run_pallas(
            _small_kernel,
            grid=grid,
            make_in_specs=make_in_specs,
            out_specs=pl.BlockSpec((L, tb), lambda i: (0, i)),
            out_shape=jax.ShapeDtypeStruct((L, B), out_dtype),
            scratch_shapes=(),
            dimension_semantics=("parallel",),
            vmem_limit=_vmem_limit_bytes(footprint),
            cost=cost,
            args=(xk, params.weight, params.bias))
        return out.T                                   # tiny (L, B) -> (B, L)

    # ---- general path: lane-padded output, optional K-tiling ----
    d_pad, l_pad = params.weight.shape
    tk = params.block_k
    nk = d_pad // tk
    align = max(_sublane(cdt), _sublane(out_dtype))
    resident = 2 * l_pad * 4                                   # bias buffers
    per_row = 2 * (tk * x_item + l_pad * out_item) + l_pad * 4  # x+out+acc
    wt_tile = 2 * tk * l_pad * w_item                           # dbl-buffered W
    tb = _pick_block_rows(B, per_row, resident + wt_tile, align,
                          block_rows=block_rows)
    grid = (pl.cdiv(B, tb), nk)
    footprint = per_row * tb + wt_tile + resident
    cost = pl.CostEstimate(
        flops=2 * B * D * l_pad, transcendentals=0,
        bytes_accessed=(B * D * x_item + d_pad * l_pad * w_item
                        + B * l_pad * out_item))
    kernel = _make_general_kernel(D, tk)

    def make_in_specs(buffered):
        mode = dict(pipeline_mode=pl.Buffered(1)) if buffered else {}
        wt_mode = mode if nk == 1 else {}          # weight varies with k if nk>1
        return [
            pl.BlockSpec((tb, tk), lambda i, k: (i, k)),            # x tile
            pl.BlockSpec((tk, l_pad), lambda i, k: (k, 0), **wt_mode),
            pl.BlockSpec((1, l_pad), lambda i, k: (0, 0), **mode),  # bias
        ]

    out = _run_pallas(
        kernel,
        grid=grid,
        make_in_specs=make_in_specs,
        out_specs=pl.BlockSpec((tb, l_pad), lambda i, k: (i, 0)),
        out_shape=jax.ShapeDtypeStruct((B, l_pad), out_dtype),
        scratch_shapes=[pltpu.VMEM((tb, l_pad), jnp.float32)],
        dimension_semantics=("parallel", "arbitrary"),
        vmem_limit=_vmem_limit_bytes(footprint),
        cost=cost,
        args=(xk, params.weight, params.bias))
    return out[:, :L]


def classifier_forward(x, weight, bias, *, dropout_rate=0.1, training=False,
                       compute_dtype=None, block_rows=None,
                       max_block_k=_MAX_BLOCK_K):
    """Convenience wrapper: prepare params + apply.  For production, call
    prepare_classifier_params() once and reuse it across forward calls."""
    params = prepare_classifier_params(weight, bias, compute_dtype=compute_dtype,
                                       max_block_k=max_block_k)
    return classifier_apply(x, params, block_rows=block_rows,
                            dropout_rate=dropout_rate, training=training)


# ----------------------------------------------------------------------------
# Self-test
# ----------------------------------------------------------------------------
if __name__ == "__main__":
    key = jax.random.PRNGKey(0)
    k_x, k_w, k_b, k_x2, k_w2, k_b2, k_x3 = jax.random.split(key, 7)

    # ---- Module's configuration: input_dim=128, num_labels=2 ----
    batch, input_dim, num_labels = 8, 128, 2
    x = jax.random.normal(k_x, (batch, input_dim), dtype=jnp.float32)
    bound = 1.0 / jnp.sqrt(jnp.float32(input_dim))
    weight = jax.random.uniform(k_w, (num_labels, input_dim), jnp.float32,
                                minval=-bound, maxval=bound)
    bias = jax.random.uniform(k_b, (num_labels,), jnp.float32,
                              minval=-bound, maxval=bound)

    out = jax.block_until_ready(classifier_forward(x, weight, bias))
    ref = x @ weight.T + bias
    assert out.shape == (batch, num_labels)
    assert jnp.allclose(out, ref, atol=1e-5, rtol=1e-5)

    # ---- Ragged batch, multiple grid steps, no wrapper-side padding ----
    batch2 = 300
    x2 = jax.random.normal(k_x2, (batch2, input_dim), dtype=jnp.float32)
    out2 = jax.block_until_ready(
        classifier_forward(x2, weight, bias, block_rows=128))
    ref2 = x2 @ weight.T + bias
    assert out2.shape == (batch2, num_labels)
    assert jnp.allclose(out2, ref2, atol=1e-5, rtol=1e-5)

    # ---- bf16 streaming option (f32 accumulate / bias add / output) ----
    out_bf = jax.block_until_ready(
        classifier_forward(x2, weight, bias, compute_dtype=jnp.bfloat16))
    assert out_bf.dtype == jnp.float32
    assert jnp.allclose(out_bf, ref2, atol=3e-2, rtol=3e-2)

    # ---- General path: many labels + K-tiled (ragged) input_dim ----
    d3, l3, b3 = 320, 130, 40
    x3 = jax.random.normal(k_x3, (b3, d3), dtype=jnp.float32)
    w3 = jax.random.normal(k_w2, (l3, d3), dtype=jnp.float32) * 0.05
    b3v = jax.random.normal(k_b2, (l3,), dtype=jnp.float32) * 0.05
    out3 = jax.block_until_ready(
        classifier_forward(x3, w3, b3v, max_block_k=128))
    ref3 = x3 @ w3.T + b3v
    assert out3.shape == (b3, l3)
    assert jnp.allclose(out3, ref3, atol=5e-4, rtol=5e-4)

    print("KERNEL_OK")
</pallas_src>

<mosaic_0001>
module attributes {stable_mosaic.version = 11 : i64} {
  func.func @_small_kernel(%arg0: i32, %arg1: memref<8x128xf32, #tpu.memory_space<vmem>>, %arg2: memref<2x128xf32, #tpu.memory_space<vmem>>, %arg3: memref<2x1xf32, #tpu.memory_space<vmem>>, %arg4: memref<2x8xf32, #tpu.memory_space<vmem>>) attributes {dimension_semantics = [#tpu.dimension_semantics<parallel>], iteration_bounds = array<i64: 1>, scalar_prefetch = 0 : i64, scratch_operands = 0 : i64, tpu.core_type = #tpu.core_type<tc>, window_params = [{transform_indices = @transform_0, window_bounds = array<i64: 8, 128>}, {pipeline_mode = #tpu.pipeline_mode<synchronous>, transform_indices = @transform_1, window_bounds = array<i64: 2, 128>}, {pipeline_mode = #tpu.pipeline_mode<synchronous>, transform_indices = @transform_2, window_bounds = array<i64: 2, 1>}, {transform_indices = @transform_3, window_bounds = array<i64: 2, 8>}]} {
    %c0 = arith.constant 0 : index
    %c0_0 = arith.constant 0 : index
    %0 = vector.load %arg2[%c0, %c0_0] : memref<2x128xf32, #tpu.memory_space<vmem>>, vector<2x128xf32>
    %c0_1 = arith.constant 0 : index
    %c0_2 = arith.constant 0 : index
    %1 = vector.load %arg1[%c0_1, %c0_2] : memref<8x128xf32, #tpu.memory_space<vmem>>, vector<8x128xf32>
    %cst = arith.constant dense<0.000000e+00> : vector<2x8xf32>
    %2 = tpu.matmul %0, %1, %cst {dimension_numbers = #tpu.dot_dimension_numbers<[1], [1], [0], [0], [0, 0, 1, 0], [], []>} : vector<2x128xf32>, vector<8x128xf32>, vector<2x8xf32> -> vector<2x8xf32>
    %c0_3 = arith.constant 0 : index
    %c0_4 = arith.constant 0 : index
    %3 = vector.load %arg3[%c0_3, %c0_4] : memref<2x1xf32, #tpu.memory_space<vmem>>, vector<2x1xf32>
    %4 = vector.broadcast %3 : vector<2x1xf32> to vector<2x8xf32>
    %5 = arith.addf %2, %4 : vector<2x8xf32>
    %c0_5 = arith.constant 0 : index
    %c0_6 = arith.constant 0 : index
    %6 = vector.load %arg4[%c0_5, %c0_6] : memref<2x8xf32, #tpu.memory_space<vmem>>, vector<2x8xf32>
    tpu.vector_store %arg4[%c0_5, %c0_6], %5 {strides = array<i32>} : memref<2x8xf32, #tpu.memory_space<vmem>>, vector<2x8xf32>,
    return
  }
  func.func @transform_0(%arg0: i32) -> (i32, i32) {
    %c0_i32 = arith.constant 0 : i32
    %c0_i32_0 = arith.constant 0 : i32
    return %arg0, %c0_i32 : i32, i32
  }
  func.func @transform_1(%arg0: i32) -> (i32, i32) {
    %c0_i32 = arith.constant 0 : i32
    %c0_i32_0 = arith.constant 0 : i32
    %c0_i32_1 = arith.constant 0 : i32
    return %c0_i32, %c0_i32_0 : i32, i32
  }
  func.func @transform_2(%arg0: i32) -> (i32, i32) {
    %c0_i32 = arith.constant 0 : i32
    %c0_i32_0 = arith.constant 0 : i32
    %c0_i32_1 = arith.constant 0 : i32
    return %c0_i32, %c0_i32_0 : i32, i32
  }
  func.func @transform_3(%arg0: i32) -> (i32, i32) {
    %c0_i32 = arith.constant 0 : i32
    %c0_i32_0 = arith.constant 0 : i32
    return %c0_i32, %arg0 : i32, i32
  }
}

module attributes {stable_mosaic.version = 11 : i64} {
  func.func @_small_kernel(%arg0: i32, %arg1: memref<8x128xf32, #tpu.memory_space<vmem>>, %arg2: memref<2x128xf32, #tpu.memory_space<vmem>>, %arg3: memref<2x1xf32, #tpu.memory_space<vmem>>, %arg4: memref<2x8xf32, #tpu.memory_space<vmem>>) attributes {dimension_semantics = [#tpu.dimension_semantics<parallel>], iteration_bounds = array<i64: 1>, scalar_prefetch = 0 : i64, scratch_operands = 0 : i64, tpu.core_type = #tpu.core_type<tc>, window_params = [{transform_indices = @transform_0, window_bounds = array<i64: 8, 128>}, {pipeline_mode = #tpu.pipeline_mode<synchronous>, transform_indices = @transform_1, window_bounds = array<i64: 2, 128>}, {pipeline_mode = #tpu.pipeline_mode<synchronous>, transform_indices = @transform_2, window_bounds = array<i64: 2, 1>}, {transform_indices = @transform_3, window_bounds = array<i64: 2, 8>}]} {
    %c0 = arith.constant 0 : index
    %c0_0 = arith.constant 0 : index
    %0 = vector.load %arg2[%c0, %c0_0] : memref<2x128xf32, #tpu.memory_space<vmem>>, vector<2x128xf32>
    %c0_1 = arith.constant 0 : index
    %c0_2 = arith.constant 0 : index
    %1 = vector.load %arg1[%c0_1, %c0_2] : memref<8x128xf32, #tpu.memory_space<vmem>>, vector<8x128xf32>
    %cst = arith.constant dense<0.000000e+00> : vector<2x8xf32>
    %2 = tpu.matmul %0, %1, %cst {dimension_numbers = #tpu.dot_dimension_numbers<[1], [1], [0], [0], [0, 0, 1, 0], [], []>} : vector<2x128xf32>, vector<8x128xf32>, vector<2x8xf32> -> vector<2x8xf32>
    %c0_3 = arith.constant 0 : index
    %c0_4 = arith.constant 0 : index
    %3 = vector.load %arg3[%c0_3, %c0_4] : memref<2x1xf32, #tpu.memory_space<vmem>>, vector<2x1xf32>
    %4 = vector.broadcast %3 : vector<2x1xf32> to vector<2x8xf32>
    %5 = arith.addf %2, %4 : vector<2x8xf32>
    %c0_5 = arith.constant 0 : index
    %c0_6 = arith.constant 0 : index
    %6 = vector.load %arg4[%c0_5, %c0_6] : memref<2x8xf32, #tpu.memory_space<vmem>>, vector<2x8xf32>
    tpu.vector_store %arg4[%c0_5, %c0_6], %5 {strides = array<i32>} : memref<2x8xf32, #tpu.memory_space<vmem>>, vector<2x8xf32>,
    return
  }
  func.func @transform_0(%arg0: i32) -> (i32, i32) {
    %c0_i32 = arith.constant 0 : i32
    %c0_i32_0 = arith.constant 0 : i32
    return %arg0, %c0_i32 : i32, i32
  }
  func.func @transform_1(%arg0: i32) -> (i32, i32) {
    %c0_i32 = arith.constant 0 : i32
    %c0_i32_0 = arith.constant 0 : i32
    %c0_i32_1 = arith.constant 0 : i32
    return %c0_i32, %c0_i32_0 : i32, i32
  }
  func.func @transform_2(%arg0: i32) -> (i32, i32) {
    %c0_i32 = arith.constant 0 : i32
    %c0_i32_0 = arith.constant 0 : i32
    %c0_i32_1 = arith.constant 0 : i32
    return %c0_i32, %c0_i32_0 : i32, i32
  }
  func.func @transform_3(%arg0: i32) -> (i32, i32) {
    %c0_i32 = arith.constant 0 : i32
    %c0_i32_0 = arith.constant 0 : i32
    return %c0_i32, %arg0 : i32, i32
  }
}

</mosaic_0001>

<llo_original>
// kernel: tpu_custom_call.1
$region0: #{tpu_custom_call.1}
  #allocation0 [shape = 'u32[]', space=smem, size = 0x4, offset = 0x4, fixed_abs, tag = 'smem constant byte address 0x4 - core index']
  #allocation1 [shape = 'u32[72,128]{1,0:T(1,128)}', space=vmem, size = 0x9000, scoped, tag = 'internal scratch']
  %s0 = inlined_call_operand.hbm [shape: f32[8,128], index: 0, kind: input, shape index: {}]
  %s1 = inlined_call_operand.vmem [shape: f32[2,128], index: 1, kind: input, shape index: {}]
  %s2 = inlined_call_operand.vmem [shape: f32[2,1], index: 2, kind: input, shape index: {}]
  %s3 = inlined_call_operand.hbm [shape: f32[2,8], index: 3, kind: output, shape index: {}]
  %s4 = sld [smem:[#allocation0]]
  $region26: #{tpu_custom_call.1} parent=0
    _
  %s6 = ssub.s32 1, %s4
  %s7 = scalar_select 0, %s6, %s4
  $region1: #{tpu_custom_call.1} parent=0
    #allocation2 [shape = 'u8[4096]{0}', space=vmem, size = 0x1000, scoped, tag = 'input window, operand 0, single buffered']
    #allocation3 [shape = 's32[1]{0}', space=sflag, size = 0x4, scoped, tag = 'scoped memory for tpu_custom_call.1']
    #allocation4 [shape = 's32[1]{0}', space=sflag, size = 0x4, scoped, tag = 'scoped memory for tpu_custom_call.1']
    #allocation5 [shape = 'u8[1024]{0}', space=vmem, size = 0x400, scoped, tag = 'output window, operand 0, single buffered']
    %8 = vsyncpa [#allocation3], 0
    %9 = vsyncpa [#allocation4], 0
    // Predicated region
    $region2: #{tpu_custom_call.1} parent=1 // pred_check
      _
    $region3: #{tpu_custom_call.1} parent=1 // pred_check_branch
      %11 = sbr.rel (0) target = $region5
    $region4: #{tpu_custom_call.1} parent=1 // pred_region
      %13 = vsyncadd [#allocation3], 0
      %s15 = sshll.u32 %s0, 4
      %s16 = int_to_ptr.hbm [resolvable:$true] %s15
      %s17 = sshll.u32 [#allocation2], 4
      %s18 = int_to_ptr.vmem [resolvable:$true] %s17
      %20 = dma.hbm_to_vmem [thread:$0]  %s16, 128, %s18, [#allocation3]
    $region5: #{tpu_custom_call.1} parent=1 // pred_fallthru
      _
    // Predicated region
    $region6: #{tpu_custom_call.1} parent=1 // pred_check
      _
    $region7: #{tpu_custom_call.1} parent=1 // pred_check_branch
      %22 = sbr.rel (0) target = $region9
    $region8: #{tpu_custom_call.1} parent=1 // pred_region
      _
    $region9: #{tpu_custom_call.1} parent=1 // pred_fallthru
      _
    // Predicated region
    $region10: #{tpu_custom_call.1} parent=1 // pred_check
      _
    $region11: #{tpu_custom_call.1} parent=1 // pred_check_branch
      %24 = sbr.rel (0) target = $region13
    $region12: #{tpu_custom_call.1} parent=1 // pred_region
      _
    $region13: #{tpu_custom_call.1} parent=1 // pred_fallthru
      _
    // Predicated region
    $region14: #{tpu_custom_call.1} parent=1 // pred_check
      _
    $region15: #{tpu_custom_call.1} parent=1 // pred_check_branch
      %26 = sbr.rel (0) target = $region17
    $region16: #{tpu_custom_call.1} parent=1 // pred_region
      %28 = dma.done [#allocation3], 128
    $region17: #{tpu_custom_call.1} parent=1 // pred_fallthru
      _
    %v29 = vld [vmem:[%s1] sm:$0x3]
    %v30 = vld [vmem:[#allocation2] sm:$0xff]
    %v31 = vld [vmem:[%s2] sm:$0x3]
    %33 = vset.pattern.permute.xlu0 0
    %34 = vperm.xlu0 %33, %v31
    %v35 = vpop.permute.xlu0 %34
    %37 = vmatpush.xpose.msra.mxu0 0.0
    %38 = vmatpush.xpose.msra.mxu0 0.0
    %39 = vmatpush.xpose.msra.mxu0 0.0
    %40 = vmatpush.xpose.msra.mxu0 0.0
    %41 = vmatpush.xpose.msra.mxu0 0.0
    %42 = vmatpush.xpose.msra.mxu0 0.0
    %43 = vmatpush.xpose.msra.mxu0 0.0
    %44 = vmatpush.xpose.msra.mxu0 0.0
    %45 = vmatpush.xpose.msra.mxu0 0.0
    %46 = vmatpush.xpose.msra.mxu0 0.0
    %47 = vmatpush.xpose.msra.mxu0 0.0
    %48 = vmatpush.xpose.msra.mxu0 0.0
    %49 = vmatpush.xpose.msra.mxu0 0.0
    %50 = vmatpush.xpose.msra.mxu0 0.0
    %51 = vmatpush.xpose.msra.mxu0 0.0
    %52 = vmatpush.xpose.msra.mxu0 %v30
    %53 = vmatmul.f32.gmra.mxu0 %v29
    %v54 = vpop.f32.mrf.mxu0
    %v55 = vadd.f32 %v35, %v54
    %56 = vdwg.mxu0
    %vm57 = vcmask 58368
    %58 = vst.msk [vmem:[#allocation5] sm:$0x3] %vm57, %v55
    // Predicated region
    $region18: #{tpu_custom_call.1} parent=1 // pred_check
      _
    $region19: #{tpu_custom_call.1} parent=1 // pred_check_branch
      %60 = sbr.rel (0) target = $region21
    $region20: #{tpu_custom_call.1} parent=1 // pred_region
      %62 = vsyncadd [#allocation4], 0
      %s64 = sshll.u32 [#allocation5], 4
      %s65 = int_to_ptr.vmem [resolvable:$true] %s64
      %s66 = sshll.u32 %s3, 4
      %s67 = int_to_ptr.hbm [resolvable:$true] %s66
      %69 = dma.vmem_to_hbm [thread:$0]  %s65, 32, %s67, [#allocation4]
    $region21: #{tpu_custom_call.1} parent=1 // pred_fallthru
      _
    // Predicated region
    $region22: #{tpu_custom_call.1} parent=1 // pred_check
      _
    $region23: #{tpu_custom_call.1} parent=1 // pred_check_branch
      %71 = sbr.rel (0) target = $region25
    $region24: #{tpu_custom_call.1} parent=1 // pred_region
      %73 = dma.done [#allocation4], 32
    $region25: #{tpu_custom_call.1} parent=1 // pred_fallthru
      _
    %74 = vsyncpa [#allocation3], 1
    %75 = vsyncpa [#allocation4], 1

// kernel: tpu_custom_call.1
$region0: #{tpu_custom_call.1}
  #allocation0 [shape = 'u32[]', space=smem, size = 0x4, offset = 0x4, fixed_abs, tag = 'smem constant byte address 0x4 - core index']
  #allocation1 [shape = 'u32[72,128]{1,0:T(1,128)}', space=vmem, size = 0x9000, scoped, tag = 'internal scratch']
  %s0 = inlined_call_operand.hbm [shape: f32[8,128], index: 0, kind: input, shape index: {}]
  %s1 = inlined_call_operand.vmem [shape: f32[2,128], index: 1, kind: input, shape index: {}]
  %s2 = inlined_call_operand.vmem [shape: f32[2,1], index: 2, kind: input, shape index: {}]
  %s3 = inlined_call_operand.hbm [shape: f32[2,8], index: 3, kind: output, shape index: {}]
  %s4 = sld [smem:[#allocation0]]
  $region26: #{tpu_custom_call.1} parent=0
    _
  %s6 = ssub.s32 1, %s4
  %s7 = scalar_select 0, %s6, %s4
  $region1: #{tpu_custom_call.1} parent=0
    #allocation2 [shape = 'u8[4096]{0}', space=vmem, size = 0x1000, scoped, tag = 'input window, operand 0, single buffered']
    #allocation3 [shape = 's32[1]{0}', space=sflag, size = 0x4, scoped, tag = 'scoped memory for tpu_custom_call.1']
    #allocation4 [shape = 's32[1]{0}', space=sflag, size = 0x4, scoped, tag = 'scoped memory for tpu_custom_call.1']
    #allocation5 [shape = 'u8[1024]{0}', space=vmem, size = 0x400, scoped, tag = 'output window, operand 0, single buffered']
    %8 = vsyncpa [#allocation3], 0
    %9 = vsyncpa [#allocation4], 0
    // Predicated region
    $region2: #{tpu_custom_call.1} parent=1 // pred_check
      _
    $region3: #{tpu_custom_call.1} parent=1 // pred_check_branch
      %11 = sbr.rel (0) target = $region5
    $region4: #{tpu_custom_call.1} parent=1 // pred_region
      %13 = vsyncadd [#allocation3], 0
      %s15 = sshll.u32 %s0, 4
      %s16 = int_to_ptr.hbm [resolvable:$true] %s15
      %s17 = sshll.u32 [#allocation2], 4
      %s18 = int_to_ptr.vmem [resolvable:$true] %s17
      %20 = dma.hbm_to_vmem [thread:$0]  %s16, 128, %s18, [#allocation3]
    $region5: #{tpu_custom_call.1} parent=1 // pred_fallthru
      _
    // Predicated region
    $region6: #{tpu_custom_call.1} parent=1 // pred_check
      _
    $region7: #{tpu_custom_call.1} parent=1 // pred_check_branch
      %22 = sbr.rel (0) target = $region9
    $region8: #{tpu_custom_call.1} parent=1 // pred_region
      _
    $region9: #{tpu_custom_call.1} parent=1 // pred_fallthru
      _
    // Predicated region
    $region10: #{tpu_custom_call.1} parent=1 // pred_check
      _
    $region11: #{tpu_custom_call.1} parent=1 // pred_check_branch
      %24 = sbr.rel (0) target = $region13
    $region12: #{tpu_custom_call.1} parent=1 // pred_region
      _
    $region13: #{tpu_custom_call.1} parent=1 // pred_fallthru
      _
    // Predicated region
    $region14: #{tpu_custom_call.1} parent=1 // pred_check
      _
    $region15: #{tpu_custom_call.1} parent=1 // pred_check_branch
      %26 = sbr.rel (0) target = $region17
    $region16: #{tpu_custom_call.1} parent=1 // pred_region
      %28 = dma.done [#allocation3], 128
    $region17: #{tpu_custom_call.1} parent=1 // pred_fallthru
      _
    %v29 = vld [vmem:[%s1] sm:$0x3]
    %v30 = vld [vmem:[#allocation2] sm:$0xff]
    %v31 = vld [vmem:[%s2] sm:$0x3]
    %33 = vset.pattern.permute.xlu0 0
    %34 = vperm.xlu0 %33, %v31
    %v35 = vpop.permute.xlu0 %34
    %37 = vmatpush.xpose.msra.mxu0 0.0
    %38 = vmatpush.xpose.msra.mxu0 0.0
    %39 = vmatpush.xpose.msra.mxu0 0.0
    %40 = vmatpush.xpose.msra.mxu0 0.0
    %41 = vmatpush.xpose.msra.mxu0 0.0
    %42 = vmatpush.xpose.msra.mxu0 0.0
    %43 = vmatpush.xpose.msra.mxu0 0.0
    %44 = vmatpush.xpose.msra.mxu0 0.0
    %45 = vmatpush.xpose.msra.mxu0 0.0
    %46 = vmatpush.xpose.msra.mxu0 0.0
    %47 = vmatpush.xpose.msra.mxu0 0.0
    %48 = vmatpush.xpose.msra.mxu0 0.0
    %49 = vmatpush.xpose.msra.mxu0 0.0
    %50 = vmatpush.xpose.msra.mxu0 0.0
    %51 = vmatpush.xpose.msra.mxu0 0.0
    %52 = vmatpush.xpose.msra.mxu0 %v30
    %53 = vmatmul.f32.gmra.mxu0 %v29
    %v54 = vpop.f32.mrf.mxu0
    %v55 = vadd.f32 %v35, %v54
    %56 = vdwg.mxu0
    %vm57 = vcmask 58368
    %58 = vst.msk [vmem:[#allocation5] sm:$0x3] %vm57, %v55
    // Predicated region
    $region18: #{tpu_custom_call.1} parent=1 // pred_check
      _
    $region19: #{tpu_custom_call.1} parent=1 // pred_check_branch
      %60 = sbr.rel (0) target = $region21
    $region20: #{tpu_custom_call.1} parent=1 // pred_region
      %62 = vsyncadd [#allocation4], 0
      %s64 = sshll.u32 [#allocation5], 4
      %s65 = int_to_ptr.vmem [resolvable:$true] %s64
      %s66 = sshll.u32 %s3, 4
      %s67 = int_to_ptr.hbm [resolvable:$true] %s66
      %69 = dma.vmem_to_hbm [thread:$0]  %s65, 32, %s67, [#allocation4]
    $region21: #{tpu_custom_call.1} parent=1 // pred_fallthru
      _
    // Predicated region
    $region22: #{tpu_custom_call.1} parent=1 // pred_check
      _
    $region23: #{tpu_custom_call.1} parent=1 // pred_check_branch
      %71 = sbr.rel (0) target = $region25
    $region24: #{tpu_custom_call.1} parent=1 // pred_region
      %73 = dma.done [#allocation4], 32
    $region25: #{tpu_custom_call.1} parent=1 // pred_fallthru
      _
    %74 = vsyncpa [#allocation3], 1
    %75 = vsyncpa [#allocation4], 1

</llo_original>
